<compile_context>
chip_gen: v7x
topology: tpu7x:2x2x1
jax: 0.10.0
libtpu: 0.0.40
codegen_flags: <defaults>
</compile_context>

<pallas_src>
import jax
import jax.numpy as jnp
from jax.experimental import pallas as pl
from jax.experimental.pallas import tpu as pltpu


_LANE = 128
_SUBLANE = 8


def _round_up(n, m):
    return ((n + m - 1) // m) * m


def _vmem_limit_bytes():
    """Generation-aware VMEM limit (leave ~25% headroom for compiler scratch)."""
    cap = 64 * 1024 * 1024  # conservative default: v7x per-TensorCore VMEM
    try:
        info = pltpu.get_tpu_info()
        cap = int(getattr(info, "vmem_capacity_bytes", cap)) or cap
    except Exception:
        pass
    limit = int(cap * 3 // 4)
    return max(32 * 1024 * 1024, min(limit, 112 * 1024 * 1024))


def _choose_blocks(B, O, I, w_itemsize, budget):
    """Pick (block_b, block_o, block_i) so one W tile stays within `budget`."""
    min_bb = B if B <= _SUBLANE else _SUBLANE

    def bb_for(bo, bi):
        per_sample = max(bo * bi * w_itemsize, 1)
        bb = budget // per_sample
        if B <= _SUBLANE:
            return B if bb >= B else 0
        return min((bb // _SUBLANE) * _SUBLANE, _round_up(B, _SUBLANE))

    block_o, block_i = O, I

    # Doesn't fit even with the minimum batch block: tile the reduction axis I
    # first (keeps the output store a single lane-dense slab).
    if bb_for(block_o, block_i) < min_bb and I > _LANE:
        target = (budget // max(min_bb * block_o * w_itemsize, 1)) // _LANE * _LANE
        target = max(_LANE, min(target, _round_up(I, _LANE)))
        if I % _LANE == 0:
            # Prefer a 128-multiple that divides I exactly (no ragged tail).
            block_i = _LANE
            for cand in range(target, _LANE - 1, -_LANE):
                if I % cand == 0:
                    block_i = cand
                    break
        else:
            # Ragged reduction tail is masked in-kernel (no HBM padding of W).
            block_i = target

    # Still too big (huge O): tile the output axis as well.
    if bb_for(block_o, block_i) < min_bb and O > _LANE:
        target = (budget // max(min_bb * block_i * w_itemsize, 1)) // _LANE * _LANE
        block_o = max(_LANE, min(target, _round_up(O, _LANE)))

    block_b = max(bb_for(block_o, block_i), min_bb)
    return int(block_b), int(block_o), int(block_i)


def _make_kernel(block_i, i_total):
    rem_i = i_total % block_i  # static; >0 only when I is tiled with a ragged tail

    def kernel(x_ref, w_ref, b_ref, o_ref, acc_ref):
        ii = pl.program_id(2)
        n_i = pl.num_programs(2)

        @pl.when(ii == 0)
        def _init():
            acc_ref[...] = jnp.zeros_like(acc_ref)

        w = w_ref[...]                      # native dtype: no whole-tile upcast of W
        x = x_ref[...]
        if x.dtype != w.dtype:
            x = x.astype(w.dtype)           # x tile is tiny; cast it, not W

        if rem_i:
            # Ragged reduction tail: zero the out-of-range I lanes in-kernel
            # instead of padding W in HBM (mask both operands so garbage/NaN
            # beyond the array can never reach the accumulator).
            limit = jnp.where(ii == n_i - 1, rem_i, block_i)
            w = jnp.where(
                jax.lax.broadcasted_iota(jnp.int32, w.shape, 2) < limit,
                w, jnp.zeros_like(w))
            x = jnp.where(
                jax.lax.broadcasted_iota(jnp.int32, x.shape, 1) < limit,
                x, jnp.zeros_like(x))

        # Per-sample matvec on the MXU: (BB,1,BI) x (BB,BO,BI) contracted over
        # I -> (BB,1,BO), f32 accumulation (same batched-dot form as flash
        # attention's q @ k^T with M=1).
        prod = jnp.einsum("bri,boi->bro", x[:, None, :], w,
                          preferred_element_type=jnp.float32)
        acc_ref[...] += prod[:, 0, :]

        @pl.when(ii == n_i - 1)
        def _finalize():
            o_ref[...] = (acc_ref[...] + b_ref[...].astype(jnp.float32)
                          ).astype(o_ref.dtype)

    return kernel


def target_mlp_forward(x, W, b):
    """Batched per-sample linear: y[i] = W[i] @ x[i] + b[i]."""
    B, I = x.shape
    Bw, O, Iw = W.shape
    assert (Bw, Iw) == (B, I) and b.shape == (B, O)
    out_dtype = jnp.result_type(x.dtype, W.dtype, b.dtype)

    vmem_limit = _vmem_limit_bytes()
    w_tile_budget = vmem_limit // 3  # W is double-buffered; leave room for x/b/out/acc
    block_b, block_o, block_i = _choose_blocks(
        B, O, I, jnp.dtype(W.dtype).itemsize, w_tile_budget)

    grid_b = pl.cdiv(B, block_b)
    grid_o = pl.cdiv(O, block_o)
    # v7x has 2 TensorCores; give the parallel axes >= 2 blocks when B allows,
    # by shrinking block_b rather than running a 1-block grid.
    if grid_b * grid_o < 2 and B > _SUBLANE:
        block_b = max(_SUBLANE, _round_up(pl.cdiv(B, 2), _SUBLANE))
        grid_b = pl.cdiv(B, block_b)
    grid_i = pl.cdiv(I, block_i)
    grid = (grid_b, grid_o, grid_i)

    kernel = _make_kernel(block_i=block_i, i_total=I)

    w_bytes = jnp.dtype(W.dtype).itemsize
    cost = pl.CostEstimate(
        flops=2 * B * O * I,
        transcendentals=0,
        bytes_accessed=(w_bytes * B * O * I
                        + jnp.dtype(x.dtype).itemsize * B * I * grid_o
                        + jnp.dtype(b.dtype).itemsize * B * O
                        + jnp.dtype(out_dtype).itemsize * B * O),
    )

    return pl.pallas_call(
        kernel,
        out_shape=jax.ShapeDtypeStruct((B, O), out_dtype),
        grid_spec=pltpu.PrefetchScalarGridSpec(
            num_scalar_prefetch=0,
            grid=grid,
            in_specs=[
                pl.BlockSpec((block_b, block_i),
                             lambda ib, io, ii: (ib, ii)),            # x
                pl.BlockSpec((block_b, block_o, block_i),
                             lambda ib, io, ii: (ib, io, ii)),        # W
                pl.BlockSpec((block_b, block_o),
                             lambda ib, io, ii: (ib, io)),            # b
            ],
            out_specs=pl.BlockSpec((block_b, block_o),
                                   lambda ib, io, ii: (ib, io)),
            scratch_shapes=[pltpu.VMEM((block_b, block_o), jnp.float32)],
        ),
        compiler_params=pltpu.CompilerParams(
            dimension_semantics=("parallel", "parallel", "arbitrary"),
            vmem_limit_bytes=vmem_limit,
        ),
        cost_estimate=cost,
    )(x, W, b)


def make_unused_linear_params(in_features, out_features, key):
    """Deterministic init of the module's (unused) nn.Linear parameters."""
    kw, kb = jax.random.split(key)
    bound = 1.0 / jnp.sqrt(in_features)
    w = jax.random.uniform(kw, (out_features, in_features),
                           minval=-bound, maxval=bound, dtype=jnp.float32)
    bias = jax.random.uniform(kb, (out_features,),
                              minval=-bound, maxval=bound, dtype=jnp.float32)
    return w, bias


if __name__ == "__main__":
    key = jax.random.PRNGKey(0)
    k_x, k_w, k_b, k_lin = jax.random.split(key, 4)

    B, in_features, out_features = 2, 32, 16

    x = jax.random.normal(k_x, (B, in_features), dtype=jnp.float32)
    W = jax.random.normal(k_w, (B, out_features, in_features), dtype=jnp.float32)
    b = jax.random.normal(k_b, (B, out_features), dtype=jnp.float32)

    # Unused in forward (matches the PyTorch module, which never calls self.linear).
    _lin_w, _lin_b = make_unused_linear_params(in_features, out_features, k_lin)

    y = jax.block_until_ready(target_mlp_forward(x, W, b))

    # Pure-JAX reference check.
    y_ref = jnp.einsum("boi,bi->bo", W, x) + b
    assert y.shape == (B, out_features)
    assert jnp.allclose(y, y_ref, atol=1e-5, rtol=1e-5), "mismatch vs reference"

    print("KERNEL_OK")
</pallas_src>

<mosaic_0001>
module attributes {stable_mosaic.version = 11 : i64} {
  func.func @kernel(%arg0: i32, %arg1: i32, %arg2: i32, %arg3: memref<2x32xf32, #tpu.memory_space<vmem>>, %arg4: memref<2x16x32xf32, #tpu.memory_space<vmem>>, %arg5: memref<2x16xf32, #tpu.memory_space<vmem>>, %arg6: memref<2x16xf32, #tpu.memory_space<vmem>>, %arg7: memref<2x16xf32, #tpu.memory_space<vmem>>) attributes {dimension_semantics = [#tpu.dimension_semantics<parallel>, #tpu.dimension_semantics<parallel>, #tpu.dimension_semantics<arbitrary>], iteration_bounds = array<i64: 1, 1, 1>, scalar_prefetch = 0 : i64, scratch_operands = 1 : i64, tpu.core_type = #tpu.core_type<tc>, window_params = [{transform_indices = @transform_0, window_bounds = array<i64: 2, 32>}, {transform_indices = @transform_1, window_bounds = array<i64: 2, 16, 32>}, {transform_indices = @transform_2, window_bounds = array<i64: 2, 16>}, {transform_indices = @transform_3, window_bounds = array<i64: 2, 16>}]} {
    %c0_i32 = arith.constant 0 : i32
    %0 = arith.cmpi eq, %arg2, %c0_i32 : i32
    %1 = arith.extui %0 : i1 to i32
    %c0_i32_0 = arith.constant 0 : i32
    %2 = arith.cmpi ne, %1, %c0_i32_0 : i32
    scf.if %2 {
      %cst_11 = arith.constant 0.000000e+00 : f32
      %14 = vector.broadcast %cst_11 : f32 to vector<2x16xf32>
      %c0_12 = arith.constant 0 : index
      %c0_13 = arith.constant 0 : index
      %15 = vector.load %arg7[%c0_12, %c0_13] : memref<2x16xf32, #tpu.memory_space<vmem>>, vector<2x16xf32>
      tpu.vector_store %arg7[%c0_12, %c0_13], %14 {strides = array<i32>} : memref<2x16xf32, #tpu.memory_space<vmem>>, vector<2x16xf32>,
    } else {
    }
    %c0 = arith.constant 0 : index
    %c0_1 = arith.constant 0 : index
    %c0_2 = arith.constant 0 : index
    %3 = vector.load %arg4[%c0, %c0_1, %c0_2] : memref<2x16x32xf32, #tpu.memory_space<vmem>>, vector<2x16x32xf32>
    %c0_3 = arith.constant 0 : index
    %c0_4 = arith.constant 0 : index
    %4 = vector.load %arg3[%c0_3, %c0_4] : memref<2x32xf32, #tpu.memory_space<vmem>>, vector<2x32xf32>
    %5 = vector.shape_cast %4 : vector<2x32xf32> to vector<2x1x32xf32>
    "tpu.trace_start"() <{level = 10 : i32, message = "bri,boi->bro"}> : () -> ()
    %cst = arith.constant dense<0.000000e+00> : vector<2x1x16xf32>
    %6 = tpu.matmul %5, %3, %cst {dimension_numbers = #tpu.dot_dimension_numbers<[2], [2], [1], [1], [0, 0, 0, 1, 1, 1], [0], [0]>} : vector<2x1x32xf32>, vector<2x16x32xf32>, vector<2x1x16xf32> -> vector<2x1x16xf32>
    "tpu.trace_stop"() : () -> ()
    %c0_5 = arith.constant 0 : index
    %c0_6 = arith.constant 0 : index
    %7 = vector.load %arg7[%c0_5, %c0_6] : memref<2x16xf32, #tpu.memory_space<vmem>>, vector<2x16xf32>
    %8 = vector.shape_cast %6 : vector<2x1x16xf32> to vector<2x16xf32>
    %9 = arith.addf %7, %8 : vector<2x16xf32>
    %c0_7 = arith.constant 0 : index
    %c0_8 = arith.constant 0 : index
    %10 = vector.load %arg7[%c0_7, %c0_8] : memref<2x16xf32, #tpu.memory_space<vmem>>, vector<2x16xf32>
    tpu.vector_store %arg7[%c0_7, %c0_8], %9 {strides = array<i32>} : memref<2x16xf32, #tpu.memory_space<vmem>>, vector<2x16xf32>,
    %c0_i32_9 = arith.constant 0 : i32
    %11 = arith.cmpi eq, %arg2, %c0_i32_9 : i32
    %12 = arith.extui %11 : i1 to i32
    %c0_i32_10 = arith.constant 0 : i32
    %13 = arith.cmpi ne, %12, %c0_i32_10 : i32
    scf.if %13 {
      %c0_11 = arith.constant 0 : index
      %c0_12 = arith.constant 0 : index
      %14 = vector.load %arg7[%c0_11, %c0_12] : memref<2x16xf32, #tpu.memory_space<vmem>>, vector<2x16xf32>
      %c0_13 = arith.constant 0 : index
      %c0_14 = arith.constant 0 : index
      %15 = vector.load %arg5[%c0_13, %c0_14] : memref<2x16xf32, #tpu.memory_space<vmem>>, vector<2x16xf32>
      %16 = arith.addf %14, %15 : vector<2x16xf32>
      %c0_15 = arith.constant 0 : index
      %c0_16 = arith.constant 0 : index
      %17 = vector.load %arg6[%c0_15, %c0_16] : memref<2x16xf32, #tpu.memory_space<vmem>>, vector<2x16xf32>
      tpu.vector_store %arg6[%c0_15, %c0_16], %16 {strides = array<i32>} : memref<2x16xf32, #tpu.memory_space<vmem>>, vector<2x16xf32>,
    } else {
    }
    return
  }
  func.func @transform_0(%arg0: i32, %arg1: i32, %arg2: i32) -> (i32, i32) {
    %c0_i32 = arith.constant 0 : i32
    return %arg0, %arg2 : i32, i32
  }
  func.func @transform_1(%arg0: i32, %arg1: i32, %arg2: i32) -> (i32, i32, i32) {
    %c0_i32 = arith.constant 0 : i32
    return %arg0, %arg1, %arg2 : i32, i32, i32
  }
  func.func @transform_2(%arg0: i32, %arg1: i32, %arg2: i32) -> (i32, i32) {
    %c0_i32 = arith.constant 0 : i32
    return %arg0, %arg1 : i32, i32
  }
  func.func @transform_3(%arg0: i32, %arg1: i32, %arg2: i32) -> (i32, i32) {
    %c0_i32 = arith.constant 0 : i32
    return %arg0, %arg1 : i32, i32
  }
}

</mosaic_0001>

<llo_original>
// kernel: tpu_custom_call.1
$region0: #{tpu_custom_call.1}
  #allocation0 [shape = 'u32[]', space=smem, size = 0x4, offset = 0x4, fixed_abs, tag = 'smem constant byte address 0x4 - core index']
  #allocation1 [shape = 'u32[144,128]{1,0:T(1,128)}', space=vmem, size = 0x12000, scoped, tag = 'internal scratch']
  #allocation2 [shape = 'f32[2,16]{1,0:T(2,128)}', space=vmem, size = 0x400, scoped, tag = 'scratch operand']
  %s0 = inlined_call_operand.hbm [shape: f32[2,32], index: 0, kind: input, shape index: {}]
  %s1 = inlined_call_operand.hbm [shape: f32[2,16,32], index: 1, kind: input, shape index: {}]
  %s2 = inlined_call_operand.vmem [shape: f32[2,16], index: 2, kind: input, shape index: {}]
  %s3 = inlined_call_operand.hbm [shape: f32[2,16], index: 3, kind: output, shape index: {}]
  %s4 = sld [smem:[#allocation0]]
  $region38: #{tpu_custom_call.1} parent=0
    _
  %s6 = ssub.s32 1, %s4
  %s7 = scalar_select 0, %s6, %s4
  $region1: #{tpu_custom_call.1} parent=0
    #allocation3 [shape = 'u8[1024]{0}', space=vmem, size = 0x400, scoped, tag = 'input window, operand 0, single buffered']
    #allocation4 [shape = 's32[1]{0}', space=sflag, size = 0x4, scoped, tag = 'scoped memory for tpu_custom_call.1']
    #allocation5 [shape = 's32[1]{0}', space=sflag, size = 0x4, scoped, tag = 'scoped memory for tpu_custom_call.1']
    #allocation6 [shape = 'u8[16384]{0}', space=vmem, size = 0x4000, scoped, tag = 'input window, operand 1, single buffered']
    #allocation7 [shape = 's32[1]{0}', space=sflag, size = 0x4, scoped, tag = 'scoped memory for tpu_custom_call.1']
    #allocation8 [shape = 'u8[1024]{0}', space=vmem, size = 0x400, scoped, tag = 'output window, operand 0, single buffered']
    %8 = vsyncpa [#allocation4], 0
    %9 = vsyncpa [#allocation7], 0
    %10 = vsyncpa [#allocation5], 0
    // Predicated region
    $region2: #{tpu_custom_call.1} parent=1 // pred_check
      _
    $region3: #{tpu_custom_call.1} parent=1 // pred_check_branch
      %12 = sbr.rel (0) target = $region5
    $region4: #{tpu_custom_call.1} parent=1 // pred_region
      %s14 = ssub.s32 32, 32
      %15 = vsyncadd [#allocation4], %s14
      %s17 = sshll.u32 [#allocation3], 4
      %s18 = int_to_ptr.vmem [resolvable:$true] %s17
      %20 = dma.hbm_to_vmem [thread:$0]  %s0, 32, %s18, [#allocation4]
    $region5: #{tpu_custom_call.1} parent=1 // pred_fallthru
      _
    // Predicated region
    $region6: #{tpu_custom_call.1} parent=1 // pred_check
      _
    $region7: #{tpu_custom_call.1} parent=1 // pred_check_branch
      %22 = sbr.rel (0) target = $region9
    $region8: #{tpu_custom_call.1} parent=1 // pred_region
      %s24 = ssub.s32 512, 512
      %25 = vsyncadd [#allocation7], %s24
      %s26 = sshll.u32 [#allocation6], 4
      %s27 = int_to_ptr.vmem [resolvable:$true] %s26
      %32 = dma.hbm_to_vmem [thread:$0]  %s1, 512, %s27, [#allocation7], 128, 128, 8
    $region9: #{tpu_custom_call.1} parent=1 // pred_fallthru
      _
    // Predicated region
    $region10: #{tpu_custom_call.1} parent=1 // pred_check
      _
    $region11: #{tpu_custom_call.1} parent=1 // pred_check_branch
      %34 = sbr.rel (0) target = $region13
    $region12: #{tpu_custom_call.1} parent=1 // pred_region
      _
    $region13: #{tpu_custom_call.1} parent=1 // pred_fallthru
      _
    // Predicated region
    $region14: #{tpu_custom_call.1} parent=1 // pred_check
      _
    $region15: #{tpu_custom_call.1} parent=1 // pred_check_branch
      %36 = sbr.rel (0) target = $region17
    $region16: #{tpu_custom_call.1} parent=1 // pred_region
      %37 = dma.done [#allocation4], 32
    $region17: #{tpu_custom_call.1} parent=1 // pred_fallthru
      _
    // Predicated region
    $region18: #{tpu_custom_call.1} parent=1 // pred_check
      _
    $region19: #{tpu_custom_call.1} parent=1 // pred_check_branch
      %39 = sbr.rel (0) target = $region21
    $region20: #{tpu_custom_call.1} parent=1 // pred_region
      %40 = dma.done [#allocation7], 512
    $region21: #{tpu_custom_call.1} parent=1 // pred_fallthru
      _
    %p41 = scmp.eq.s32.totalorder 0, 0
    // Predicated region
    $region22: #{tpu_custom_call.1} parent=1 // pred_check
      %p42 = pneg %p41
    $region23: #{tpu_custom_call.1} parent=1 // pred_check_branch
      %44 = sbr.rel (%p42) target = $region25
    $region24: #{tpu_custom_call.1} parent=1 // pred_region
      %vm45 = vcmask 123904
      %46 = vst.msk [vmem:[#allocation2] sm:$0x3] %vm45, 0.0
    $region25: #{tpu_custom_call.1} parent=1 // pred_fallthru
      _
    %v47 = vld [vmem:[#allocation6] sm:$0xff]
    %v48 = vld [vmem:[#allocation6 + $0x8] sm:$0xff]
    %v49 = vld [vmem:[#allocation6 + $0x10] sm:$0xff]
    %v50 = vld [vmem:[#allocation6 + $0x18] sm:$0xff]
    %v51 = vld [vmem:[#allocation3] sm:$0x3]
    %v54 = vunpack.c.l.s4 1966171168
    %v55 = vunpack.c.0.s8 %v54
    %v56 = vlaneseq
    %v57 = vshrl.u32 %v56, 7
    %v58 = vsub.s32 %v55, %v57
    %v59 = vrot.slane %v51, %v58
    %v60 = vcombine.high %v59, %v59
    %v62 = vunpack.c.l.s4 1966171168
    %v63 = vunpack.c.0.s8 %v62
    %v64 = vlaneseq
    %v65 = vshrl.u32 %v64, 7
    %v66 = vsub.s32 %v63, %v65
    %v67 = vrot.slane %v59, %v66
    %v69 = vunpack.c.l.s4 1966171168
    %v70 = vunpack.c.0.s8 %v69
    %v71 = vlaneseq
    %v72 = vshrl.u32 %v71, 7
    %v73 = vsub.s32 %v70, %v72
    %v74 = vrot.slane %v60, %v73
    %vm75 = vcmask 261120
    %v76 = vsel %vm75, %v67, 0
    %v79 = vsel %vm75, %v47, 0
    %v82 = vsel %vm75, %v48, 0
    %84 = vmatprep.subr.mxu0 0.0
    %85 = vmatpush1.xpose.msra.mxu0 %v79
    %86 = vmatprep.subr.mxu0 0.0
    %87 = vmatpush1.xpose.msra.mxu0 %v82
    %88 = vmatprep.subr.mxu0 0.0
    %89 = vmatpush1.xpose.msra.mxu0 0.0
    %90 = vmatprep.subr.mxu0 0.0
    %91 = vmatpush1.xpose.msra.mxu0 0.0
    %92 = vmatprep.subr.mxu0 0.0
    %93 = vmatpush1.xpose.msra.mxu0 0.0
    %94 = vmatprep.subr.mxu0 0.0
    %95 = vmatpush1.xpose.msra.mxu0 0.0
    %96 = vmatprep.subr.mxu0 0.0
    %97 = vmatpush1.xpose.msra.mxu0 0.0
    %98 = vmatprep.subr.mxu0 0.0
    %99 = vmatpush1.xpose.msra.mxu0 0.0
    %100 = vmatprep.subr.mxu0 0.0
    %101 = vmatpush1.xpose.msra.mxu0 0.0
    %102 = vmatprep.subr.mxu0 0.0
    %103 = vmatpush1.xpose.msra.mxu0 0.0
    %104 = vmatprep.subr.mxu0 0.0
    %105 = vmatpush1.xpose.msra.mxu0 0.0
    %106 = vmatprep.subr.mxu0 0.0
    %107 = vmatpush1.xpose.msra.mxu0 0.0
    %108 = vmatprep.subr.mxu0 0.0
    %109 = vmatpush1.xpose.msra.mxu0 0.0
    %110 = vmatprep.subr.mxu0 0.0
    %111 = vmatpush1.xpose.msra.mxu0 0.0
    %112 = vmatprep.subr.mxu0 0.0
    %113 = vmatpush1.xpose.msra.mxu0 0.0
    %114 = vmatprep.subr.mxu0 0.0
    %115 = vmatpush1.xpose.msra.mxu0 0.0
    %116 = vmatprep.subr.mxu0 0.0
    %117 = vmatpush1.xpose.msra.mxu0 0.0
    %118 = vmatprep.subr.mxu0 0.0
    %119 = vmatpush1.xpose.msra.mxu0 0.0
    %120 = vmatprep.subr.mxu0 0.0
    %121 = vmatpush1.xpose.msra.mxu0 0.0
    %122 = vmatprep.subr.mxu0 0.0
    %123 = vmatpush1.xpose.msra.mxu0 0.0
    %124 = vmatprep.subr.mxu0 0.0
    %125 = vmatpush1.xpose.msra.mxu0 0.0
    %126 = vmatprep.subr.mxu0 0.0
    %127 = vmatpush1.xpose.msra.mxu0 0.0
    %128 = vmatprep.subr.mxu0 0.0
    %129 = vmatpush1.xpose.msra.mxu0 0.0
    %130 = vmatprep.subr.mxu0 0.0
    %131 = vmatpush1.xpose.msra.mxu0 0.0
    %132 = vmatprep.subr.mxu0 0.0
    %133 = vmatpush1.xpose.msra.mxu0 0.0
    %134 = vmatprep.subr.mxu0 0.0
    %135 = vmatpush1.xpose.msra.mxu0 0.0
    %136 = vmatprep.subr.mxu0 0.0
    %137 = vmatpush1.xpose.msra.mxu0 0.0
    %138 = vmatprep.subr.mxu0 0.0
    %139 = vmatpush1.xpose.msra.mxu0 0.0
    %140 = vmatprep.subr.mxu0 0.0
    %141 = vmatpush1.xpose.msra.mxu0 0.0
    %142 = vmatprep.subr.mxu0 0.0
    %143 = vmatpush1.xpose.msra.mxu0 0.0
    %144 = vmatprep.subr.mxu0 0.0
    %145 = vmatpush1.xpose.msra.mxu0 0.0
    %146 = vmatprep.subr.mxu0 0.0
    %147 = vmatpush1.xpose.msra.mxu0 0.0
    %148 = vmatprep.mubr.f32.mxu0 0.0
    %149 = vmatmul.mubr.f32.gmra.mrb[0].mxu0 %v76
    %v150 = vpop.f32.mrb[0].mxu0
    %v151 = vadd.f32 0.0, %v150
    %v152 = vpop.f32.mrb[0].mxu0
    %153 = vdwg.mxu0
    %v154 = vsel %vm75, %v74, 0
    %v157 = vsel %vm75, %v49, 0
    %v160 = vsel %vm75, %v50, 0
    %162 = vmatprep.subr.mxu0 0.0
    %163 = vmatpush1.xpose.msra.mxu0 %v157
    %164 = vmatprep.subr.mxu0 0.0
    %165 = vmatpush1.xpose.msra.mxu0 %v160
    %166 = vmatprep.subr.mxu0 0.0
    %167 = vmatpush1.xpose.msra.mxu0 0.0
    %168 = vmatprep.subr.mxu0 0.0
    %169 = vmatpush1.xpose.msra.mxu0 0.0
    %170 = vmatprep.subr.mxu0 0.0
    %171 = vmatpush1.xpose.msra.mxu0 0.0
    %172 = vmatprep.subr.mxu0 0.0
    %173 = vmatpush1.xpose.msra.mxu0 0.0
    %174 = vmatprep.subr.mxu0 0.0
    %175 = vmatpush1.xpose.msra.mxu0 0.0
    %176 = vmatprep.subr.mxu0 0.0
    %177 = vmatpush1.xpose.msra.mxu0 0.0
    %178 = vmatprep.subr.mxu0 0.0
    %179 = vmatpush1.xpose.msra.mxu0 0.0
    %180 = vmatprep.subr.mxu0 0.0
    %181 = vmatpush1.xpose.msra.mxu0 0.0
    %182 = vmatprep.subr.mxu0 0.0
    %183 = vmatpush1.xpose.msra.mxu0 0.0
    %184 = vmatprep.subr.mxu0 0.0
    %185 = vmatpush1.xpose.msra.mxu0 0.0
    %186 = vmatprep.subr.mxu0 0.0
    %187 = vmatpush1.xpose.msra.mxu0 0.0
    %188 = vmatprep.subr.mxu0 0.0
    %189 = vmatpush1.xpose.msra.mxu0 0.0
    %190 = vmatprep.subr.mxu0 0.0
    %191 = vmatpush1.xpose.msra.mxu0 0.0
    %192 = vmatprep.subr.mxu0 0.0
    %193 = vmatpush1.xpose.msra.mxu0 0.0
    %194 = vmatprep.subr.mxu0 0.0
    %195 = vmatpush1.xpose.msra.mxu0 0.0
    %196 = vmatprep.subr.mxu0 0.0
    %197 = vmatpush1.xpose.msra.mxu0 0.0
    %198 = vmatprep.subr.mxu0 0.0
    %199 = vmatpush1.xpose.msra.mxu0 0.0
    %200 = vmatprep.subr.mxu0 0.0
    %201 = vmatpush1.xpose.msra.mxu0 0.0
    %202 = vmatprep.subr.mxu0 0.0
    %203 = vmatpush1.xpose.msra.mxu0 0.0
    %204 = vmatprep.subr.mxu0 0.0
    %205 = vmatpush1.xpose.msra.mxu0 0.0
    %206 = vmatprep.subr.mxu0 0.0
    %207 = vmatpush1.xpose.msra.mxu0 0.0
    %208 = vmatprep.subr.mxu0 0.0
    %209 = vmatpush1.xpose.msra.mxu0 0.0
    %210 = vmatprep.subr.mxu0 0.0
    %211 = vmatpush1.xpose.msra.mxu0 0.0
    %212 = vmatprep.subr.mxu0 0.0
    %213 = vmatpush1.xpose.msra.mxu0 0.0
    %214 = vmatprep.subr.mxu0 0.0
    %215 = vmatpush1.xpose.msra.mxu0 0.0
    %216 = vmatprep.subr.mxu0 0.0
    %217 = vmatpush1.xpose.msra.mxu0 0.0
    %218 = vmatprep.subr.mxu0 0.0
    %219 = vmatpush1.xpose.msra.mxu0 0.0
    %220 = vmatprep.subr.mxu0 0.0
    %221 = vmatpush1.xpose.msra.mxu0 0.0
    %222 = vmatprep.subr.mxu0 0.0
    %223 = vmatpush1.xpose.msra.mxu0 0.0
    %224 = vmatprep.subr.mxu0 0.0
    %225 = vmatpush1.xpose.msra.mxu0 0.0
    %226 = vmatprep.mubr.f32.mxu0 0.0
    %227 = vmatmul.mubr.f32.gmra.mrb[0].mxu0 %v154
    %v228 = vpop.f32.mrb[0].mxu0
    %v229 = vadd.f32 0.0, %v228
    %v230 = vpop.f32.mrb[0].mxu0
    %231 = vdwg.mxu0
    %v232 = vld [vmem:[#allocation2] sm:$0x3]
    %v235 = vrot.slane %v229, 7
    %vm236 = vcmask 1041409
    %v237 = vsel %vm236, %v235, %v151
    %v239 = vadd.f32 %v232, %v237
    %vm240 = vcmask 123904
    %241 = vst.msk [vmem:[#allocation2] sm:$0x3] %vm240, %v239
    // Predicated region
    $region26: #{tpu_custom_call.1} parent=1 // pred_check
      %p242 = pneg %p41
    $region27: #{tpu_custom_call.1} parent=1 // pred_check_branch
      %244 = sbr.rel (%p242) target = $region29
    $region28: #{tpu_custom_call.1} parent=1 // pred_region
      %v245 = vld [vmem:[#allocation2] sm:$0x3]
      %v246 = vld [vmem:[%s2] sm:$0x3]
      %v247 = vadd.f32 %v245, %v246
      %248 = vst.msk [vmem:[#allocation8] sm:$0x3] %vm240, %v247
    $region29: #{tpu_custom_call.1} parent=1 // pred_fallthru
      _
    // Predicated region
    $region30: #{tpu_custom_call.1} parent=1 // pred_check
      _
    $region31: #{tpu_custom_call.1} parent=1 // pred_check_branch
      %250 = sbr.rel (0) target = $region33
    $region32: #{tpu_custom_call.1} parent=1 // pred_region
      %s252 = ssub.s32 32, 32
      %253 = vsyncadd [#allocation5], %s252
      %s255 = sshll.u32 [#allocation8], 4
      %s256 = int_to_ptr.vmem [resolvable:$true] %s255
      %258 = dma.vmem_to_hbm [thread:$0]  %s256, 32, %s3, [#allocation5]
    $region33: #{tpu_custom_call.1} parent=1 // pred_fallthru
      _
    // Predicated region
    $region34: #{tpu_custom_call.1} parent=1 // pred_check
      _
    $region35: #{tpu_custom_call.1} parent=1 // pred_check_branch
      %260 = sbr.rel (0) target = $region37
    $region36: #{tpu_custom_call.1} parent=1 // pred_region
      %261 = dma.done [#allocation5], 32
    $region37: #{tpu_custom_call.1} parent=1 // pred_fallthru
      _
    %262 = vsyncpa [#allocation4], 1
    %263 = vsyncpa [#allocation7], 1
    %264 = vsyncpa [#allocation5], 1

</llo_original>
